<compile_context>
chip_gen: v7x
topology: tpu7x:2x2x1
jax: 0.10.0
libtpu: 0.0.40
codegen_flags: <defaults>
</compile_context>

<pallas_src>
import functools

import jax
import jax.numpy as jnp
from jax.experimental import pallas as pl
from jax.experimental.pallas import tpu as pltpu  # noqa: F401  (TPU backend)

LANE = 128
SUBLANE = 8


def _round_up(n, m):
    return -(-n // m) * m


# ---------------------------------------------------------------------------
# Fused Pallas kernel: encoder -> reparameterize -> decoder, all in VMEM/vregs
# ---------------------------------------------------------------------------
def _vae_fused_kernel(x_ref, eps_ref,
                      we1_ref, whd_ref, wd1_ref, wd2_ref,
                      bias_ref,
                      recon_ref, mulv_ref,
                      *, hp, lp):
    bf = we1_ref.dtype  # bf16 MXU operand dtype

    # Static, lane-aligned slices of the packed bias vector (single DMA input).
    b_e1 = bias_ref[:, 0:hp]                              # (1, hp)
    b_hd = bias_ref[:, hp:hp + 2 * lp]                    # (1, 2*lp)  mu||logvar biases
    b_d1 = bias_ref[:, hp + 2 * lp:2 * hp + 2 * lp]       # (1, hp)
    b_d2 = bias_ref[:, 2 * hp + 2 * lp:]                  # (1, fp)

    # ---- Encoder: h = relu(x @ We1 + be1)  (bf16 MXU, f32 accumulate) ----
    h = jnp.dot(x_ref[...], we1_ref[...], preferred_element_type=jnp.float32) + b_e1
    h = jnp.maximum(h, 0.0)

    # ---- Fused mu/logvar head: lane-dense (M, 2*lp), split at lane-tile boundary ----
    mulv = jnp.dot(h.astype(bf), whd_ref[...],
                   preferred_element_type=jnp.float32) + b_hd
    mu = mulv[:, :lp]
    logvar = mulv[:, lp:]

    # ---- Reparameterize: z = mu + eps * exp(0.5 * logvar)  (f32 elementwise) ----
    std = jnp.exp(0.5 * logvar)
    z = mu + eps_ref[...] * std          # padded lanes: logvar=0, eps=0 -> z = mu = 0

    # ---- Decoder: relu(z @ Wd1 + bd1) @ Wd2 + bd2 ----
    hd = jnp.dot(z.astype(bf), wd1_ref[...], preferred_element_type=jnp.float32) + b_d1
    hd = jnp.maximum(hd, 0.0)
    out = jnp.dot(hd.astype(bf), wd2_ref[...], preferred_element_type=jnp.float32) + b_d2

    recon_ref[...] = out.astype(recon_ref.dtype)
    mulv_ref[...] = mulv                 # always f32 (logvar precision)


def _full_spec(shape):
    nd = len(shape)
    return pl.BlockSpec(shape, lambda *_: (0,) * nd)


# ---------------------------------------------------------------------------
# Wrapper: pads to lane/sublane-dense tiles, casts MXU operands to bf16,
# packs biases, runs one fused pallas_call, strips padding.
# ---------------------------------------------------------------------------
def vae_forward(params, x, eps):
    B, C, T, V = x.shape
    feat = C * T * V
    hidden = params["We1"].shape[1]
    latent = params["Wmu"].shape[1]

    fp = max(LANE, _round_up(feat, LANE))      # padded feature dim
    hp = max(LANE, _round_up(hidden, LANE))    # padded hidden dim
    lp = max(LANE, _round_up(latent, LANE))    # padded latent dim (mu width == logvar width)
    Mp = max(SUBLANE, _round_up(B, SUBLANE))   # padded batch (full sublane rows)

    f32 = jnp.float32
    bf16 = jnp.bfloat16

    # ---- layout prep: zero-pad to dense tiles ----
    x_flat = jnp.pad(x.reshape(B, feat).astype(f32), ((0, Mp - B), (0, fp - feat)))
    eps_p = jnp.pad(eps.astype(f32), ((0, Mp - B), (0, lp - latent)))

    we1 = jnp.pad(params["We1"].astype(f32), ((0, fp - feat), (0, hp - hidden)))
    wmu = jnp.pad(params["Wmu"].astype(f32), ((0, hp - hidden), (0, lp - latent)))
    wlv = jnp.pad(params["Wlv"].astype(f32), ((0, hp - hidden), (0, lp - latent)))
    whd = jnp.concatenate([wmu, wlv], axis=1)                     # (hp, 2*lp)
    wd1 = jnp.pad(params["Wd1"].astype(f32), ((0, lp - latent), (0, hp - hidden)))
    wd2 = jnp.pad(params["Wd2"].astype(f32), ((0, hp - hidden), (0, fp - feat)))

    be1 = jnp.pad(params["be1"].astype(f32), (0, hp - hidden))
    bmu = jnp.pad(params["bmu"].astype(f32), (0, lp - latent))
    blv = jnp.pad(params["blv"].astype(f32), (0, lp - latent))
    bd1 = jnp.pad(params["bd1"].astype(f32), (0, hp - hidden))
    bd2 = jnp.pad(params["bd2"].astype(f32), (0, fp - feat))
    bias = jnp.concatenate([be1, bmu, blv, bd1, bd2]).reshape(1, -1)  # (1, 2*hp+2*lp+fp)

    # MXU operands -> bf16 (elementwise / reparam math stays f32 in-kernel).
    x_bf = x_flat.astype(bf16)
    we1_bf, whd_bf, wd1_bf, wd2_bf = (w.astype(bf16) for w in (we1, whd, wd1, wd2))

    flops = 2 * Mp * (fp * hp + hp * 2 * lp + lp * hp + hp * fp)
    bytes_io = (2 * (x_bf.size + we1_bf.size + whd_bf.size + wd1_bf.size + wd2_bf.size)
                + 4 * (eps_p.size + bias.size + Mp * fp + Mp * 2 * lp))

    recon_flat, mulv = pl.pallas_call(
        functools.partial(_vae_fused_kernel, hp=hp, lp=lp),
        out_shape=(
            jax.ShapeDtypeStruct((Mp, fp), x.dtype),       # recon (lane-dense)
            jax.ShapeDtypeStruct((Mp, 2 * lp), jnp.float32),  # mu || logvar slab (f32)
        ),
        in_specs=[
            _full_spec((Mp, fp)),            # x (flattened, padded, bf16)
            _full_spec((Mp, lp)),            # eps (f32)
            _full_spec((fp, hp)),            # We1
            _full_spec((hp, 2 * lp)),        # Whead = [Wmu | Wlv], lane-aligned halves
            _full_spec((lp, hp)),            # Wd1
            _full_spec((hp, fp)),            # Wd2
            _full_spec((1, 2 * hp + 2 * lp + fp)),  # packed biases (single DMA)
        ],
        out_specs=(
            _full_spec((Mp, fp)),
            _full_spec((Mp, 2 * lp)),
        ),
        cost_estimate=pl.CostEstimate(
            flops=flops, transcendentals=Mp * lp, bytes_accessed=bytes_io),
    )(x_bf, eps_p, we1_bf, whd_bf, wd1_bf, wd2_bf, bias)

    recon = recon_flat[:B, :feat].reshape(B, C, T, V)
    mu = mulv[:B, :latent]
    logvar = mulv[:B, lp:lp + latent]
    return recon, mu, logvar


# ---------------------------------------------------------------------------
# Parameters (deterministic in-script init; logical/unpadded shapes)
# ---------------------------------------------------------------------------
def init_params(key, feat_dim, hidden_dim, latent_dim):
    ks = jax.random.split(key, 4)
    scale = 0.05
    return {
        # encoder
        "We1": scale * jax.random.normal(ks[0], (feat_dim, hidden_dim), jnp.float32),
        "be1": jnp.zeros((hidden_dim,), jnp.float32),
        # mu / logvar heads
        "Wmu": scale * jax.random.normal(ks[1], (hidden_dim, latent_dim), jnp.float32),
        "bmu": jnp.zeros((latent_dim,), jnp.float32),
        "Wlv": scale * jax.random.normal(ks[1], (hidden_dim, latent_dim), jnp.float32) * 0.5,
        "blv": jnp.zeros((latent_dim,), jnp.float32),
        # decoder
        "Wd1": scale * jax.random.normal(ks[2], (latent_dim, hidden_dim), jnp.float32),
        "bd1": jnp.zeros((hidden_dim,), jnp.float32),
        "Wd2": scale * jax.random.normal(ks[3], (hidden_dim, feat_dim), jnp.float32),
        "bd2": jnp.zeros((feat_dim,), jnp.float32),
    }


if __name__ == "__main__":
    # Small shapes consistent with the module's interface:
    #   in_channels=4, seq_len=8, num_nodes=4 (from adjacency_list), latent_dim=16
    B, C, T, V = 2, 4, 8, 4
    latent_dim = 16
    hidden_dim = 32
    feat_dim = C * T * V  # 128 (lane-aligned)

    key = jax.random.PRNGKey(0)
    k_x, k_eps, k_p = jax.random.split(key, 3)

    x = jax.random.normal(k_x, (B, C, T, V), dtype=jnp.float32)
    eps = jax.random.normal(k_eps, (B, latent_dim), dtype=jnp.float32)  # torch.randn_like(std)
    params = init_params(k_p, feat_dim, hidden_dim, latent_dim)

    recon, mu, logvar = jax.jit(vae_forward)(params, x, eps)
    jax.block_until_ready((recon, mu, logvar))

    assert recon.shape == (B, C, T, V)
    assert mu.shape == (B, latent_dim)
    assert logvar.shape == (B, latent_dim)
    assert bool(jnp.all(jnp.isfinite(recon)))
    assert bool(jnp.all(jnp.isfinite(mu)))
    assert bool(jnp.all(jnp.isfinite(logvar)))
    print("KERNEL_OK")
</pallas_src>

<mosaic_0001>
module attributes {stable_mosaic.version = 11 : i64} {
  func.func @_vae_fused_kernel(%arg0: memref<8x128xbf16, #tpu.memory_space<vmem>>, %arg1: memref<8x128xf32, #tpu.memory_space<vmem>>, %arg2: memref<128x128xbf16, #tpu.memory_space<vmem>>, %arg3: memref<128x256xbf16, #tpu.memory_space<vmem>>, %arg4: memref<128x128xbf16, #tpu.memory_space<vmem>>, %arg5: memref<128x128xbf16, #tpu.memory_space<vmem>>, %arg6: memref<1x640xf32, #tpu.memory_space<vmem>>, %arg7: memref<8x128xf32, #tpu.memory_space<vmem>>, %arg8: memref<8x256xf32, #tpu.memory_space<vmem>>) attributes {dimension_semantics = [], scalar_prefetch = 0 : i64, scratch_operands = 0 : i64, tpu.core_type = #tpu.core_type<tc>} {
    %c0 = arith.constant 0 : index
    %c0_0 = arith.constant 0 : index
    %0 = vector.load %arg6[%c0, %c0_0] : memref<1x640xf32, #tpu.memory_space<vmem>>, vector<1x128xf32>
    %c0_1 = arith.constant 0 : index
    %c128 = arith.constant 128 : index
    %1 = vector.load %arg6[%c0_1, %c128] : memref<1x640xf32, #tpu.memory_space<vmem>>, vector<1x256xf32>
    %c0_2 = arith.constant 0 : index
    %c384 = arith.constant 384 : index
    %2 = vector.load %arg6[%c0_2, %c384] : memref<1x640xf32, #tpu.memory_space<vmem>>, vector<1x128xf32>
    %c0_3 = arith.constant 0 : index
    %c512 = arith.constant 512 : index
    %3 = vector.load %arg6[%c0_3, %c512] : memref<1x640xf32, #tpu.memory_space<vmem>>, vector<1x128xf32>
    %c0_4 = arith.constant 0 : index
    %c0_5 = arith.constant 0 : index
    %4 = vector.load %arg0[%c0_4, %c0_5] : memref<8x128xbf16, #tpu.memory_space<vmem>>, vector<8x128xbf16>
    %c0_6 = arith.constant 0 : index
    %c0_7 = arith.constant 0 : index
    %5 = vector.load %arg2[%c0_6, %c0_7] : memref<128x128xbf16, #tpu.memory_space<vmem>>, vector<128x128xbf16>
    %cst = arith.constant dense<0.000000e+00> : vector<8x128xf32>
    %6 = tpu.matmul %4, %5, %cst {dimension_numbers = #tpu.dot_dimension_numbers<[1], [0], [0], [1], [0, 0, 1, 1], [], []>} : vector<8x128xbf16>, vector<128x128xbf16>, vector<8x128xf32> -> vector<8x128xf32>
    %7 = vector.broadcast %0 : vector<1x128xf32> to vector<8x128xf32>
    %8 = arith.addf %6, %7 : vector<8x128xf32>
    %cst_8 = arith.constant 0.000000e+00 : f32
    %9 = vector.broadcast %cst_8 : f32 to vector<8x128xf32>
    %10 = arith.maximumf %8, %9 : vector<8x128xf32>
    %11 = arith.truncf %10 : vector<8x128xf32> to vector<8x128xbf16>
    %c0_9 = arith.constant 0 : index
    %c0_10 = arith.constant 0 : index
    %12 = vector.load %arg3[%c0_9, %c0_10] : memref<128x256xbf16, #tpu.memory_space<vmem>>, vector<128x256xbf16>
    %cst_11 = arith.constant dense<0.000000e+00> : vector<8x256xf32>
    %13 = tpu.matmul %11, %12, %cst_11 {dimension_numbers = #tpu.dot_dimension_numbers<[1], [0], [0], [1], [0, 0, 1, 1], [], []>} : vector<8x128xbf16>, vector<128x256xbf16>, vector<8x256xf32> -> vector<8x256xf32>
    %14 = vector.broadcast %1 : vector<1x256xf32> to vector<8x256xf32>
    %15 = arith.addf %13, %14 : vector<8x256xf32>
    %16 = vector.extract_strided_slice %15 {offsets = [0, 0], sizes = [8, 128], strides = [1, 1]} : vector<8x256xf32> to vector<8x128xf32>
    %17 = vector.extract_strided_slice %15 {offsets = [0, 128], sizes = [8, 128], strides = [1, 1]} : vector<8x256xf32> to vector<8x128xf32>
    %cst_12 = arith.constant 5.000000e-01 : f32
    %18 = vector.broadcast %cst_12 : f32 to vector<8x128xf32>
    %19 = arith.mulf %18, %17 : vector<8x128xf32>
    %20 = math.exp %19 : vector<8x128xf32>
    %c0_13 = arith.constant 0 : index
    %c0_14 = arith.constant 0 : index
    %21 = vector.load %arg1[%c0_13, %c0_14] : memref<8x128xf32, #tpu.memory_space<vmem>>, vector<8x128xf32>
    %22 = arith.mulf %21, %20 : vector<8x128xf32>
    %23 = arith.addf %16, %22 : vector<8x128xf32>
    %24 = arith.truncf %23 : vector<8x128xf32> to vector<8x128xbf16>
    %c0_15 = arith.constant 0 : index
    %c0_16 = arith.constant 0 : index
    %25 = vector.load %arg4[%c0_15, %c0_16] : memref<128x128xbf16, #tpu.memory_space<vmem>>, vector<128x128xbf16>
    %cst_17 = arith.constant dense<0.000000e+00> : vector<8x128xf32>
    %26 = tpu.matmul %24, %25, %cst_17 {dimension_numbers = #tpu.dot_dimension_numbers<[1], [0], [0], [1], [0, 0, 1, 1], [], []>} : vector<8x128xbf16>, vector<128x128xbf16>, vector<8x128xf32> -> vector<8x128xf32>
    %27 = vector.broadcast %2 : vector<1x128xf32> to vector<8x128xf32>
    %28 = arith.addf %26, %27 : vector<8x128xf32>
    %cst_18 = arith.constant 0.000000e+00 : f32
    %29 = vector.broadcast %cst_18 : f32 to vector<8x128xf32>
    %30 = arith.maximumf %28, %29 : vector<8x128xf32>
    %31 = arith.truncf %30 : vector<8x128xf32> to vector<8x128xbf16>
    %c0_19 = arith.constant 0 : index
    %c0_20 = arith.constant 0 : index
    %32 = vector.load %arg5[%c0_19, %c0_20] : memref<128x128xbf16, #tpu.memory_space<vmem>>, vector<128x128xbf16>
    %cst_21 = arith.constant dense<0.000000e+00> : vector<8x128xf32>
    %33 = tpu.matmul %31, %32, %cst_21 {dimension_numbers = #tpu.dot_dimension_numbers<[1], [0], [0], [1], [0, 0, 1, 1], [], []>} : vector<8x128xbf16>, vector<128x128xbf16>, vector<8x128xf32> -> vector<8x128xf32>
    %34 = vector.broadcast %3 : vector<1x128xf32> to vector<8x128xf32>
    %35 = arith.addf %33, %34 : vector<8x128xf32>
    %c0_22 = arith.constant 0 : index
    %c0_23 = arith.constant 0 : index
    %36 = vector.load %arg7[%c0_22, %c0_23] : memref<8x128xf32, #tpu.memory_space<vmem>>, vector<8x128xf32>
    tpu.vector_store %arg7[%c0_22, %c0_23], %35 {strides = array<i32>} : memref<8x128xf32, #tpu.memory_space<vmem>>, vector<8x128xf32>,
    %c0_24 = arith.constant 0 : index
    %c0_25 = arith.constant 0 : index
    %37 = vector.load %arg8[%c0_24, %c0_25] : memref<8x256xf32, #tpu.memory_space<vmem>>, vector<8x256xf32>
    tpu.vector_store %arg8[%c0_24, %c0_25], %15 {strides = array<i32>} : memref<8x256xf32, #tpu.memory_space<vmem>>, vector<8x256xf32>,
    return
  }
}

</mosaic_0001>

<llo_original>
// kernel: custom-call
$region0: #{custom-call}
  %s0 = inlined_call_operand.vmem [shape: f32[640], index: 0, kind: output, shape index: {}]

// kernel: vae_forward.1
$region0: #{vae_forward.1}
  #allocation0 [shape = 'u32[]', space=smem, size = 0x4, offset = 0x4, fixed_abs, tag = 'smem constant byte address 0x4 - core index']
  #allocation1 [shape = 'u32[144,128]{1,0:T(1,128)}', space=vmem, size = 0x12000, scoped, tag = 'internal scratch']
  %s0 = inlined_call_operand.vmem [shape: bf16[8,128], index: 0, kind: input, shape index: {}]
  %s1 = inlined_call_operand.vmem [shape: f32[8,128], index: 1, kind: input, shape index: {}]
  %s2 = inlined_call_operand.vmem [shape: bf16[128,128], index: 2, kind: input, shape index: {}]
  %s3 = inlined_call_operand.vmem [shape: bf16[128,256], index: 3, kind: input, shape index: {}]
  %s4 = inlined_call_operand.vmem [shape: bf16[128,128], index: 4, kind: input, shape index: {}]
  %s5 = inlined_call_operand.vmem [shape: bf16[128,128], index: 5, kind: input, shape index: {}]
  %s6 = inlined_call_operand.vmem [shape: f32[1,640], index: 6, kind: input, shape index: {}]
  %s7 = inlined_call_operand.vmem [shape: f32[8,128], index: 7, kind: output, shape index: {0}]
  %s8 = inlined_call_operand.vmem [shape: f32[8,256], index: 8, kind: output, shape index: {1}]
  %9 = xla_tuple %s7, %s8
  %s10 = sld [smem:[#allocation0]]
  $region46: #{vae_forward.1} parent=0
    _
  %s12 = ssub.s32 1, %s10
  %s13 = scalar_select 0, %s12, %s10
  // Predicated region
  $region2: #{vae_forward.1} parent=0 // pred_check
    _
  $region3: #{vae_forward.1} parent=0 // pred_check_branch
    %15 = sbr.rel (0) target = $region5
  $region4: #{vae_forward.1} parent=0 // pred_region
    _
  $region5: #{vae_forward.1} parent=0 // pred_fallthru
    _
  // Predicated region
  $region6: #{vae_forward.1} parent=0 // pred_check
    _
  $region7: #{vae_forward.1} parent=0 // pred_check_branch
    %17 = sbr.rel (0) target = $region9
  $region8: #{vae_forward.1} parent=0 // pred_region
    _
  $region9: #{vae_forward.1} parent=0 // pred_fallthru
    _
  // Predicated region
  $region10: #{vae_forward.1} parent=0 // pred_check
    _
  $region11: #{vae_forward.1} parent=0 // pred_check_branch
    %19 = sbr.rel (0) target = $region13
  $region12: #{vae_forward.1} parent=0 // pred_region
    _
  $region13: #{vae_forward.1} parent=0 // pred_fallthru
    _
  // Predicated region
  $region14: #{vae_forward.1} parent=0 // pred_check
    _
  $region15: #{vae_forward.1} parent=0 // pred_check_branch
    %21 = sbr.rel (0) target = $region17
  $region16: #{vae_forward.1} parent=0 // pred_region
    _
  $region17: #{vae_forward.1} parent=0 // pred_fallthru
    _
  // Predicated region
  $region18: #{vae_forward.1} parent=0 // pred_check
    _
  $region19: #{vae_forward.1} parent=0 // pred_check_branch
    %23 = sbr.rel (0) target = $region21
  $region20: #{vae_forward.1} parent=0 // pred_region
    _
  $region21: #{vae_forward.1} parent=0 // pred_fallthru
    _
  // Predicated region
  $region22: #{vae_forward.1} parent=0 // pred_check
    _
  $region23: #{vae_forward.1} parent=0 // pred_check_branch
    %25 = sbr.rel (0) target = $region25
  $region24: #{vae_forward.1} parent=0 // pred_region
    _
  $region25: #{vae_forward.1} parent=0 // pred_fallthru
    _
  // Predicated region
  $region26: #{vae_forward.1} parent=0 // pred_check
    _
  $region27: #{vae_forward.1} parent=0 // pred_check_branch
    %27 = sbr.rel (0) target = $region29
  $region28: #{vae_forward.1} parent=0 // pred_region
    _
  $region29: #{vae_forward.1} parent=0 // pred_fallthru
    _
  %v29 = vld [vmem:[%s6] sm:$0x1]
  %v30 = vld [vmem:[%s6 + $0x1] sm:$0x3]
  %v31 = vld [vmem:[%s6 + $0x3] sm:$0x1]
  %v32 = vld [vmem:[%s6 + $0x4] sm:$0x1]
  %v33 = vld [vmem:[%s0] sm:$0xf]
  %v34 = vld [vmem:[%s2] sm:$0xf]
  %v35 = vld [vmem:[%s2 + $0x4] sm:$0xf]
  %v36 = vld [vmem:[%s2 + $0x8] sm:$0xf]
  %v37 = vld [vmem:[%s2 + $0xc] sm:$0xf]
  %v38 = vld [vmem:[%s2 + $0x10] sm:$0xf]
  %v39 = vld [vmem:[%s2 + $0x14] sm:$0xf]
  %v40 = vld [vmem:[%s2 + $0x18] sm:$0xf]
  %v41 = vld [vmem:[%s2 + $0x1c] sm:$0xf]
  %v42 = vld [vmem:[%s2 + $0x20] sm:$0xf]
  %v43 = vld [vmem:[%s2 + $0x24] sm:$0xf]
  %v44 = vld [vmem:[%s2 + $0x28] sm:$0xf]
  %v45 = vld [vmem:[%s2 + $0x2c] sm:$0xf]
  %v46 = vld [vmem:[%s2 + $0x30] sm:$0xf]
  %v47 = vld [vmem:[%s2 + $0x34] sm:$0xf]
  %v48 = vld [vmem:[%s2 + $0x38] sm:$0xf]
  %v49 = vld [vmem:[%s2 + $0x3c] sm:$0xf]
  %v51 = vlaneseq
  %v52 = vshrl.u32 %v51, 7
  %v53 = vsub.s32 0, %v52
  %v54 = vrot.slane %v29, %v53
  %v72 = vunpack.c.l.b16 %v34
  %v73 = vunpack.c.l.b16 %v35
  %v74 = vunpack.c.l.b16 %v36
  %v75 = vunpack.c.l.b16 %v37
  %v76 = vunpack.c.l.b16 %v38
  %v77 = vunpack.c.l.b16 %v39
  %v78 = vunpack.c.l.b16 %v40
  %v79 = vunpack.c.l.b16 %v41
  %v80 = vunpack.c.l.b16 %v42
  %v81 = vunpack.c.l.b16 %v43
  %v82 = vunpack.c.l.b16 %v44
  %v83 = vunpack.c.l.b16 %v45
  %v84 = vunpack.c.l.b16 %v46
  %v85 = vunpack.c.l.b16 %v47
  %v86 = vunpack.c.l.b16 %v48
  %v87 = vunpack.c.l.b16 %v49
  %v88 = vpack.c.b16 %v73, %v72
  %v89 = vpack.c.b16 %v75, %v74
  %v90 = vpack.c.b16 %v77, %v76
  %v91 = vpack.c.b16 %v79, %v78
  %v92 = vpack.c.b16 %v81, %v80
  %v93 = vpack.c.b16 %v83, %v82
  %v94 = vpack.c.b16 %v85, %v84
  %v95 = vpack.c.b16 %v87, %v86
  %104 = vmatprep.subr.bf16.mxu0 0
  %105 = vmatpush1.bf16.msra.mxu0 %v88
  %106 = vmatprep.subr.bf16.mxu0 0
  %107 = vmatpush1.bf16.msra.mxu0 %v89
  %108 = vmatprep.subr.bf16.mxu0 0
  %109 = vmatpush1.bf16.msra.mxu0 %v90
  %110 = vmatprep.subr.bf16.mxu0 0
  %111 = vmatpush1.bf16.msra.mxu0 %v91
  %112 = vmatprep.subr.bf16.mxu0 0
  %113 = vmatpush1.bf16.msra.mxu0 %v92
  %114 = vmatprep.subr.bf16.mxu0 0
  %115 = vmatpush1.bf16.msra.mxu0 %v93
  %116 = vmatprep.subr.bf16.mxu0 0
  %117 = vmatpush1.bf16.msra.mxu0 %v94
  %118 = vmatprep.subr.bf16.mxu0 0
  %119 = vmatpush1.bf16.msra.mxu0 %v95
  %120 = vmatprep.subr.bf16.mxu0 0
  %121 = vmatpush1.bf16.msra.mxu0 0
  %122 = vmatprep.subr.bf16.mxu0 0
  %123 = vmatpush1.bf16.msra.mxu0 0
  %124 = vmatprep.subr.bf16.mxu0 0
  %125 = vmatpush1.bf16.msra.mxu0 0
  %126 = vmatprep.subr.bf16.mxu0 0
  %127 = vmatpush1.bf16.msra.mxu0 0
  %128 = vmatprep.subr.bf16.mxu0 0
  %129 = vmatpush1.bf16.msra.mxu0 0
  %130 = vmatprep.subr.bf16.mxu0 0
  %131 = vmatpush1.bf16.msra.mxu0 0
  %132 = vmatprep.subr.bf16.mxu0 0
  %133 = vmatpush1.bf16.msra.mxu0 0
  %134 = vmatprep.subr.bf16.mxu0 0
  %135 = vmatpush1.bf16.msra.mxu0 0
  %136 = vmatprep.mubr.bf16.mxu0 0
  %137 = vmatmul.mubr.bf16.gmra.mrb[0].mxu0 %v33
  %v138 = vpop.f32.mrb[0].mxu0
  %v139 = vadd.f32 %v54, %v138
  %v140 = vpop.f32.mrb[0].mxu0
  %v141 = vpop.f32.mrb[0].mxu0
  %v142 = vpop.f32.mrb[0].mxu0
  %143 = vdwg.mxu0
  %v144 = vmax.f32 %v139, 0.0
  %v145 = vpack.c.bf16 %v144, %v144
  %v146 = vld [vmem:[%s3] sm:$0xff]
  %v147 = vld [vmem:[%s3 + $0x8] sm:$0xff]
  %v148 = vld [vmem:[%s3 + $0x10] sm:$0xff]
  %v149 = vld [vmem:[%s3 + $0x18] sm:$0xff]
  %v150 = vld [vmem:[%s3 + $0x20] sm:$0xff]
  %v151 = vld [vmem:[%s3 + $0x28] sm:$0xff]
  %v152 = vld [vmem:[%s3 + $0x30] sm:$0xff]
  %v153 = vld [vmem:[%s3 + $0x38] sm:$0xff]
  %v154 = vld [vmem:[%s3 + $0x40] sm:$0xff]
  %v155 = vld [vmem:[%s3 + $0x48] sm:$0xff]
  %v156 = vld [vmem:[%s3 + $0x50] sm:$0xff]
  %v157 = vld [vmem:[%s3 + $0x58] sm:$0xff]
  %v158 = vld [vmem:[%s3 + $0x60] sm:$0xff]
  %v159 = vld [vmem:[%s3 + $0x68] sm:$0xff]
  %v160 = vld [vmem:[%s3 + $0x70] sm:$0xff]
  %v161 = vld [vmem:[%s3 + $0x78] sm:$0xff]
  %v163 = vlaneseq
  %v164 = vshrl.u32 %v163, 7
  %v165 = vsub.s32 0, %v164
  %v166 = vrot.slane %v30, %v165
  %v167 = vlaneseq
  %v168 = vshrl.u32 %v167, 7
  %v169 = vsub.s32 1, %v168
  %v170 = vrot.slane %v30, %v169
  %v189 = vunpack.c.l.b16 %v146
  %v190 = vunpack.c.h.b16 %v146
  %v191 = vunpack.c.l.b16 %v147
  %v192 = vunpack.c.h.b16 %v147
  %v193 = vunpack.c.l.b16 %v148
  %v194 = vunpack.c.h.b16 %v148
  %v195 = vunpack.c.l.b16 %v149
  %v196 = vunpack.c.h.b16 %v149
  %v197 = vunpack.c.l.b16 %v150
  %v198 = vunpack.c.h.b16 %v150
  %v199 = vunpack.c.l.b16 %v151
  %v200 = vunpack.c.h.b16 %v151
  %v201 = vunpack.c.l.b16 %v152
  %v202 = vunpack.c.h.b16 %v152
  %v203 = vunpack.c.l.b16 %v153
  %v204 = vunpack.c.h.b16 %v153
  %v205 = vunpack.c.l.b16 %v154
  %v206 = vunpack.c.h.b16 %v154
  %v207 = vunpack.c.l.b16 %v155
  %v208 = vunpack.c.h.b16 %v155
  %v209 = vunpack.c.l.b16 %v156
  %v210 = vunpack.c.h.b16 %v156
  %v211 = vunpack.c.l.b16 %v157
  %v212 = vunpack.c.h.b16 %v157
  %v213 = vunpack.c.l.b16 %v158
  %v214 = vunpack.c.h.b16 %v158
  %v215 = vunpack.c.l.b16 %v159
  %v216 = vunpack.c.h.b16 %v159
  %v217 = vunpack.c.l.b16 %v160
  %v218 = vunpack.c.h.b16 %v160
  %v219 = vunpack.c.l.b16 %v161
  %v220 = vunpack.c.h.b16 %v161
  %v221 = vpack.c.b16 %v191, %v189
  %v222 = vpack.c.b16 %v192, %v190
  %v223 = vpack.c.b16 %v195, %v193
  %v224 = vpack.c.b16 %v196, %v194
  %v225 = vpack.c.b16 %v199, %v197
  %v226 = vpack.c.b16 %v200, %v198
  %v227 = vpack.c.b16 %v203, %v201
  %v228 = vpack.c.b16 %v204, %v202
  %v229 = vpack.c.b16 %v207, %v205
  %v230 = vpack.c.b16 %v208, %v206
  %v231 = vpack.c.b16 %v211, %v209
  %v232 = vpack.c.b16 %v212, %v210
  %v233 = vpack.c.b16 %v215, %v213
  %v234 = vpack.c.b16 %v216, %v214
  %v235 = vpack.c.b16 %v219, %v217
  %v236 = vpack.c.b16 %v220, %v218
  %253 = vmatprep.subr.bf16.mxu0 %v222
  %254 = vmatpush1.bf16.msra.mxu0 %v221
  %255 = vmatprep.subr.bf16.mxu0 %v224
  %256 = vmatpush1.bf16.msra.mxu0 %v223
  %257 = vmatprep.subr.bf16.mxu0 %v226
  %258 = vmatpush1.bf16.msra.mxu0 %v225
  %259 = vmatprep.subr.bf16.mxu0 %v228
  %260 = vmatpush1.bf16.msra.mxu0 %v227
  %261 = vmatprep.subr.bf16.mxu0 %v230
  %262 = vmatpush1.bf16.msra.mxu0 %v229
  %263 = vmatprep.subr.bf16.mxu0 %v232
  %264 = vmatpush1.bf16.msra.mxu0 %v231
  %265 = vmatprep.subr.bf16.mxu0 %v234
  %266 = vmatpush1.bf16.msra.mxu0 %v233
  %267 = vmatprep.subr.bf16.mxu0 %v236
  %268 = vmatpush1.bf16.msra.mxu0 %v235
  %269 = vmatprep.subr.bf16.mxu0 0
  %270 = vmatpush1.bf16.msra.mxu0 0
  %271 = vmatprep.subr.bf16.mxu0 0
  %272 = vmatpush1.bf16.msra.mxu0 0
  %273 = vmatprep.subr.bf16.mxu0 0
  %274 = vmatpush1.bf16.msra.mxu0 0
  %275 = vmatprep.subr.bf16.mxu0 0
  %276 = vmatpush1.bf16.msra.mxu0 0
  %277 = vmatprep.subr.bf16.mxu0 0
  %278 = vmatpush1.bf16.msra.mxu0 0
  %279 = vmatprep.subr.bf16.mxu0 0
  %280 = vmatpush1.bf16.msra.mxu0 0
  %281 = vmatprep.subr.bf16.mxu0 0
  %282 = vmatpush1.bf16.msra.mxu0 0
  %283 = vmatprep.subr.bf16.mxu0 0
  %284 = vmatpush1.bf16.msra.mxu0 0
  %285 = vmatprep.mubr.bf16.mxu0 0
  %286 = vmatmul.mubr.bf16.gmra.mrb[0].mxu0 %v145
  %v287 = vpop.f32.mrb[0].mxu0
  %v288 = vadd.f32 %v166, %v287
  %v289 = vpop.f32.mrb[0].mxu0
  %v290 = vadd.f32 %v170, %v289
  %v291 = vpop.f32.mrb[0].mxu0
  %v292 = vpop.f32.mrb[0].mxu0
  %293 = vdwg.mxu0
  %v294 = vmul.f32 %v290, 0.5
  %v295 = vmul.f32 %v294, 1.442695
  %v296 = vpow.pop %v295
  %v297 = vld [vmem:[%s1] sm:$0xff]
  %v298 = vmul.f32 %v297, %v296
  %v299 = vadd.f32 %v288, %v298
  %v300 = vpack.c.bf16 %v299, %v299
  %v301 = vld [vmem:[%s4] sm:$0xf]
  %v302 = vld [vmem:[%s4 + $0x4] sm:$0xf]
  %v303 = vld [vmem:[%s4 + $0x8] sm:$0xf]
  %v304 = vld [vmem:[%s4 + $0xc] sm:$0xf]
  %v305 = vld [vmem:[%s4 + $0x10] sm:$0xf]
  %v306 = vld [vmem:[%s4 + $0x14] sm:$0xf]
  %v307 = vld [vmem:[%s4 + $0x18] sm:$0xf]
  %v308 = vld [vmem:[%s4 + $0x1c] sm:$0xf]
  %v309 = vld [vmem:[%s4 + $0x20] sm:$0xf]
  %v310 = vld [vmem:[%s4 + $0x24] sm:$0xf]
  %v311 = vld [vmem:[%s4 + $0x28] sm:$0xf]
  %v312 = vld [vmem:[%s4 + $0x2c] sm:$0xf]
  %v313 = vld [vmem:[%s4 + $0x30] sm:$0xf]
  %v314 = vld [vmem:[%s4 + $0x34] sm:$0xf]
  %v315 = vld [vmem:[%s4 + $0x38] sm:$0xf]
  %v316 = vld [vmem:[%s4 + $0x3c] sm:$0xf]
  %v318 = vlaneseq
  %v319 = vshrl.u32 %v318, 7
  %v320 = vsub.s32 0, %v319
  %v321 = vrot.slane %v31, %v320
  %v339 = vunpack.c.l.b16 %v301
  %v340 = vunpack.c.l.b16 %v302
  %v341 = vunpack.c.l.b16 %v303
  %v342 = vunpack.c.l.b16 %v304
  %v343 = vunpack.c.l.b16 %v305
  %v344 = vunpack.c.l.b16 %v306
  %v345 = vunpack.c.l.b16 %v307
  %v346 = vunpack.c.l.b16 %v308
  %v347 = vunpack.c.l.b16 %v309
  %v348 = vunpack.c.l.b16 %v310
  %v349 = vunpack.c.l.b16 %v311
  %v350 = vunpack.c.l.b16 %v312
  %v351 = vunpack.c.l.b16 %v313
  %v352 = vunpack.c.l.b16 %v314
  %v353 = vunpack.c.l.b16 %v315
  %v354 = vunpack.c.l.b16 %v316
  %v355 = vpack.c.b16 %v340, %v339
  %v356 = vpack.c.b16 %v342, %v341
  %v357 = vpack.c.b16 %v344, %v343
  %v358 = vpack.c.b16 %v346, %v345
  %v359 = vpack.c.b16 %v348, %v347
  %v360 = vpack.c.b16 %v350, %v349
  %v361 = vpack.c.b16 %v352, %v351
  %v362 = vpack.c.b16 %v354, %v353
  %371 = vmatprep.subr.bf16.mxu0 0
  %372 = vmatpush1.bf16.msra.mxu0 %v355
  %373 = vmatprep.subr.bf16.mxu0 0
  %374 = vmatpush1.bf16.msra.mxu0 %v356
  %375 = vmatprep.subr.bf16.mxu0 0
  %376 = vmatpush1.bf16.msra.mxu0 %v357
  %377 = vmatprep.subr.bf16.mxu0 0
  %378 = vmatpush1.bf16.msra.mxu0 %v358
  %379 = vmatprep.subr.bf16.mxu0 0
  %380 = vmatpush1.bf16.msra.mxu0 %v359
  %381 = vmatprep.subr.bf16.mxu0 0
  %382 = vmatpush1.bf16.msra.mxu0 %v360
  %383 = vmatprep.subr.bf16.mxu0 0
  %384 = vmatpush1.bf16.msra.mxu0 %v361
  %385 = vmatprep.subr.bf16.mxu0 0
  %386 = vmatpush1.bf16.msra.mxu0 %v362
  %387 = vmatprep.subr.bf16.mxu0 0
  %388 = vmatpush1.bf16.msra.mxu0 0
  %389 = vmatprep.subr.bf16.mxu0 0
  %390 = vmatpush1.bf16.msra.mxu0 0
  %391 = vmatprep.subr.bf16.mxu0 0
  %392 = vmatpush1.bf16.msra.mxu0 0
  %393 = vmatprep.subr.bf16.mxu0 0
  %394 = vmatpush1.bf16.msra.mxu0 0
  %395 = vmatprep.subr.bf16.mxu0 0
  %396 = vmatpush1.bf16.msra.mxu0 0
  %397 = vmatprep.subr.bf16.mxu0 0
  %398 = vmatpush1.bf16.msra.mxu0 0
  %399 = vmatprep.subr.bf16.mxu0 0
  %400 = vmatpush1.bf16.msra.mxu0 0
  %401 = vmatprep.subr.bf16.mxu0 0
  %402 = vmatpush1.bf16.msra.mxu0 0
  %403 = vmatprep.mubr.bf16.mxu0 0
  %404 = vmatmul.mubr.bf16.gmra.mrb[0].mxu0 %v300
  %v405 = vpop.f32.mrb[0].mxu0
  %v406 = vadd.f32 %v321, %v405
  %v407 = vpop.f32.mrb[0].mxu0
  %v408 = vpop.f32.mrb[0].mxu0
  %v409 = vpop.f32.mrb[0].mxu0
  %410 = vdwg.mxu0
  %v411 = vmax.f32 %v406, 0.0
  %v412 = vpack.c.bf16 %v411, %v411
  %v413 = vld [vmem:[%s5] sm:$0xf]
  %v414 = vld [vmem:[%s5 + $0x4] sm:$0xf]
  %v415 = vld [vmem:[%s5 + $0x8] sm:$0xf]
  %v416 = vld [vmem:[%s5 + $0xc] sm:$0xf]
  %v417 = vld [vmem:[%s5 + $0x10] sm:$0xf]
  %v418 = vld [vmem:[%s5 + $0x14] sm:$0xf]
  %v419 = vld [vmem:[%s5 + $0x18] sm:$0xf]
  %v420 = vld [vmem:[%s5 + $0x1c] sm:$0xf]
  %v421 = vld [vmem:[%s5 + $0x20] sm:$0xf]
  %v422 = vld [vmem:[%s5 + $0x24] sm:$0xf]
  %v423 = vld [vmem:[%s5 + $0x28] sm:$0xf]
  %v424 = vld [vmem:[%s5 + $0x2c] sm:$0xf]
  %v425 = vld [vmem:[%s5 + $0x30] sm:$0xf]
  %v426 = vld [vmem:[%s5 + $0x34] sm:$0xf]
  %v427 = vld [vmem:[%s5 + $0x38] sm:$0xf]
  %v428 = vld [vmem:[%s5 + $0x3c] sm:$0xf]
  %v430 = vlaneseq
  %v431 = vshrl.u32 %v430, 7
  %v432 = vsub.s32 0, %v431
  %v433 = vrot.slane %v32, %v432
  %v451 = vunpack.c.l.b16 %v413
  %v452 = vunpack.c.l.b16 %v414
  %v453 = vunpack.c.l.b16 %v415
  %v454 = vunpack.c.l.b16 %v416
  %v455 = vunpack.c.l.b16 %v417
  %v456 = vunpack.c.l.b16 %v418
  %v457 = vunpack.c.l.b16 %v419
  %v458 = vunpack.c.l.b16 %v420
  %v459 = vunpack.c.l.b16 %v421
  %v460 = vunpack.c.l.b16 %v422
  %v461 = vunpack.c.l.b16 %v423
  %v462 = vunpack.c.l.b16 %v424
  %v463 = vunpack.c.l.b16 %v425
  %v464 = vunpack.c.l.b16 %v426
  %v465 = vunpack.c.l.b16 %v427
  %v466 = vunpack.c.l.b16 %v428
  %v467 = vpack.c.b16 %v452, %v451
  %v468 = vpack.c.b16 %v454, %v453
  %v469 = vpack.c.b16 %v456, %v455
  %v470 = vpack.c.b16 %v458, %v457
  %v471 = vpack.c.b16 %v460, %v459
  %v472 = vpack.c.b16 %v462, %v461
  %v473 = vpack.c.b16 %v464, %v463
  %v474 = vpack.c.b16 %v466, %v465
  %483 = vmatprep.subr.bf16.mxu0 0
  %484 = vmatpush1.bf16.msra.mxu0 %v467
  %485 = vmatprep.subr.bf16.mxu0 0
  %486 = vmatpush1.bf16.msra.mxu0 %v468
  %487 = vmatprep.subr.bf16.mxu0 0
  %488 = vmatpush1.bf16.msra.mxu0 %v469
  %489 = vmatprep.subr.bf16.mxu0 0
  %490 = vmatpush1.bf16.msra.mxu0 %v470
  %491 = vmatprep.subr.bf16.mxu0 0
  %492 = vmatpush1.bf16.msra.mxu0 %v471
  %493 = vmatprep.subr.bf16.mxu0 0
  %494 = vmatpush1.bf16.msra.mxu0 %v472
  %495 = vmatprep.subr.bf16.mxu0 0
  %496 = vmatpush1.bf16.msra.mxu0 %v473
  %497 = vmatprep.subr.bf16.mxu0 0
  %498 = vmatpush1.bf16.msra.mxu0 %v474
  %499 = vmatprep.subr.bf16.mxu0 0
  %500 = vmatpush1.bf16.msra.mxu0 0
  %501 = vmatprep.subr.bf16.mxu0 0
  %502 = vmatpush1.bf16.msra.mxu0 0
  %503 = vmatprep.subr.bf16.mxu0 0
  %504 = vmatpush1.bf16.msra.mxu0 0
  %505 = vmatprep.subr.bf16.mxu0 0
  %506 = vmatpush1.bf16.msra.mxu0 0
  %507 = vmatprep.subr.bf16.mxu0 0
  %508 = vmatpush1.bf16.msra.mxu0 0
  %509 = vmatprep.subr.bf16.mxu0 0
  %510 = vmatpush1.bf16.msra.mxu0 0
  %511 = vmatprep.subr.bf16.mxu0 0
  %512 = vmatpush1.bf16.msra.mxu0 0
  %513 = vmatprep.subr.bf16.mxu0 0
  %514 = vmatpush1.bf16.msra.mxu0 0
  %515 = vmatprep.mubr.bf16.mxu0 0
  %516 = vmatmul.mubr.bf16.gmra.mrb[0].mxu0 %v412
  %v517 = vpop.f32.mrb[0].mxu0
  %v518 = vadd.f32 %v433, %v517
  %v519 = vpop.f32.mrb[0].mxu0
  %v520 = vpop.f32.mrb[0].mxu0
  %v521 = vpop.f32.mrb[0].mxu0
  %522 = vdwg.mxu0
  %523 = vst [vmem:[%s7] sm:$0xff] %v518
  %524 = vst [vmem:[%s8] sm:$0xff] %v288
  %525 = vst [vmem:[%s8 + $0x8] sm:$0xff] %v290
  // Predicated region
  $region30: #{vae_forward.1} parent=0 // pred_check
    _
  $region31: #{vae_forward.1} parent=0 // pred_check_branch
    %527 = sbr.rel (0) target = $region33
  $region32: #{vae_forward.1} parent=0 // pred_region
    _
  $region33: #{vae_forward.1} parent=0 // pred_fallthru
    _
  // Predicated region
  $region34: #{vae_forward.1} parent=0 // pred_check
    _
  $region35: #{vae_forward.1} parent=0 // pred_check_branch
    %529 = sbr.rel (0) target = $region37
  $region36: #{vae_forward.1} parent=0 // pred_region
    _
  $region37: #{vae_forward.1} parent=0 // pred_fallthru
    _
  // Predicated region
  $region38: #{vae_forward.1} parent=0 // pred_check
    _
  $region39: #{vae_forward.1} parent=0 // pred_check_branch
    %531 = sbr.rel (0) target = $region41
  $region40: #{vae_forward.1} parent=0 // pred_region
    _
  $region41: #{vae_forward.1} parent=0 // pred_fallthru
    _
  // Predicated region
  $region42: #{vae_forward.1} parent=0 // pred_check
    _
  $region43: #{vae_forward.1} parent=0 // pred_check_branch
    %533 = sbr.rel (0) target = $region45
  $region44: #{vae_forward.1} parent=0 // pred_region
    _
  $region45: #{vae_forward.1} parent=0 // pred_fallthru
    _

</llo_original>
